<compile_context>
chip_gen: v5e
topology: v5e:2x2
jax: 0.10.0
libtpu: 0.0.40
codegen_flags: <defaults>
</compile_context>

<pallas_src>
import jax
import jax.numpy as jnp
from jax.experimental import pallas as pl
from jax.experimental.pallas import tpu as pltpu


def receiver_kernel(x_ref, w1_ref, b1_ref, w2_ref, b2_ref, out_ref):
    # x: (tb, H) f32/bf16; w1: (H, 4F) bf16; b1: (1, 4F) f32
    # w2: (4F, 2F) bf16;   b2: (1, 2F) f32;  out: (2, tb, F) f32
    x = x_ref[...].astype(jnp.bfloat16)                       # MXU-native operand
    h = jnp.dot(x, w1_ref[...], preferred_element_type=jnp.float32) + b1_ref[...]
    h = jnp.where(h > 0, h, 0.01 * h)                         # leaky_relu, slope 0.01
    o = jnp.dot(h.astype(jnp.bfloat16), w2_ref[...],
                preferred_element_type=jnp.float32) + b2_ref[...]   # (tb, 2F)
    n_f = out_ref.shape[-1]
    out_ref[0, :, :] = o[:, :n_f].astype(out_ref.dtype)       # fc2_1 head
    out_ref[1, :, :] = o[:, n_f:].astype(out_ref.dtype)       # fc2_2 head


def _round_up(x, m):
    return ((x + m - 1) // m) * m


def _choose_tiling(B, cap=2048):
    """Pick (batch_tile, n_grid_steps).

    Tile is a multiple of 8.  Guarantees >= 2 grid steps whenever B >= 16 so
    dimension_semantics=("parallel",) can shard across v7x's two TensorCores
    and the HBM<->VMEM pipeline double-buffers; caps the tile at `cap` rows so
    per-step DMA traffic amortizes the ~0.35us grid-step overhead.
    """
    if B < 16:
        return _round_up(max(B, 1), 8), 1
    n = max(2, pl.cdiv(B, cap))
    tb = _round_up(pl.cdiv(B, n), 8)
    n = pl.cdiv(B, tb)
    return tb, n


def receiver_forward(x, params):
    """x: (B, n_hidden); params: dict of pre-transposed weights/biases.

    Returns (2, B, n_features) f32, matching torch.stack([fc2_1(h), fc2_2(h)]).
    """
    B, H = x.shape
    F = params["w2a"].shape[1]
    F4 = 4 * F

    # Fuse the two output heads (one lane-denser matmul, one MXU drain/tile);
    # weights to bf16 for native MXU rate, biases stay f32 (added to f32 acc).
    w1 = params["w1"].astype(jnp.bfloat16)                              # (H, 4F)
    b1 = params["b1"].astype(jnp.float32)                               # (1, 4F)
    w2 = jnp.concatenate([params["w2a"], params["w2b"]],
                         axis=1).astype(jnp.bfloat16)                   # (4F, 2F)
    b2 = jnp.concatenate([params["b2a"], params["b2b"]],
                         axis=1).astype(jnp.float32)                    # (1, 2F)

    tb, n_steps = _choose_tiling(B)
    Bp = tb * n_steps
    if Bp != B:
        # Pad indivisible batches to a tile multiple (rows computed then
        # sliced off) instead of one giant un-pipelined block.
        x = jnp.pad(x, ((0, Bp - B), (0, 0)))

    flops = 2 * Bp * (H * F4 + F4 * 2 * F)
    bytes_accessed = (x.size * x.dtype.itemsize      # x tiles
                      + w1.size * 2 + b1.size * 4    # resident weights/biases
                      + w2.size * 2 + b2.size * 4
                      + 2 * Bp * F * 4)              # f32 output
    cost = pl.CostEstimate(flops=flops, transcendentals=0,
                           bytes_accessed=bytes_accessed)

    out = pl.pallas_call(
        receiver_kernel,
        out_shape=jax.ShapeDtypeStruct((2, Bp, F), jnp.float32),
        grid_spec=pltpu.PrefetchScalarGridSpec(
            num_scalar_prefetch=0,
            grid=(n_steps,),
            in_specs=[
                pl.BlockSpec((tb, H), lambda i: (i, 0)),        # x tile
                pl.BlockSpec((H, F4), lambda i: (0, 0)),        # w1 (resident)
                pl.BlockSpec((1, F4), lambda i: (0, 0)),        # b1 (resident)
                pl.BlockSpec((F4, 2 * F), lambda i: (0, 0)),    # fused w2
                pl.BlockSpec((1, 2 * F), lambda i: (0, 0)),     # fused b2
            ],
            out_specs=pl.BlockSpec((2, tb, F), lambda i: (0, i, 0)),
        ),
        compiler_params=pltpu.CompilerParams(
            dimension_semantics=("parallel",)),   # megacore sharding on v7x
        cost_estimate=cost,
    )(x, w1, b1, w2, b2)

    if Bp != B:
        out = out[:, :B, :]
    return out


def init_params(key, n_hidden, n_features):
    """PyTorch-style uniform(-1/sqrt(fan_in), 1/sqrt(fan_in)) init.

    Weights are stored transposed, shape (in_features, out_features), so the
    kernel computes x @ W directly.  Biases are 2D (1, out).
    """
    k = jax.random.split(key, 6)
    f4 = n_features * 4

    def u(kk, shape, fan_in):
        bound = 1.0 / jnp.sqrt(jnp.float32(fan_in))
        return jax.random.uniform(kk, shape, jnp.float32, -bound, bound)

    return {
        "w1":  u(k[0], (n_hidden, f4), n_hidden),
        "b1":  u(k[1], (1, f4), n_hidden),
        "w2a": u(k[2], (f4, n_features), f4),
        "b2a": u(k[3], (1, n_features), f4),
        "w2b": u(k[4], (f4, n_features), f4),
        "b2b": u(k[5], (1, n_features), f4),
    }


def receiver_reference(x, params):
    """Pure-JAX f32 reference mirroring the PyTorch forward."""
    h = x @ params["w1"] + params["b1"]
    h = jnp.where(h > 0, h, 0.01 * h)
    o1 = h @ params["w2a"] + params["b2a"]
    o2 = h @ params["w2b"] + params["b2b"]
    return jnp.stack([o1, o2])


if __name__ == "__main__":
    key = jax.random.PRNGKey(0)
    k_param, k1, k2, k3 = jax.random.split(key, 4)

    n_hidden = 32
    n_features = 32      # 4 * n_features = 128 -> lane-aligned hidden dim
    params = init_params(k_param, n_hidden, n_features)

    fwd = jax.jit(receiver_forward)

    def run_check(batch, kk):
        x = jax.random.normal(kk, (batch, n_hidden), jnp.float32)
        out = jax.block_until_ready(fwd(x, params))
        ref = receiver_reference(x, params)
        assert out.shape == (2, batch, n_features), out.shape
        # bf16 MXU operands with f32 accumulation -> loosened tolerance
        # vs. the pure-f32 reference.
        assert jnp.allclose(out, ref, atol=1e-1, rtol=5e-2), float(
            jnp.max(jnp.abs(out - ref)))

    run_check(8, k1)     # tiny batch: single 8-row grid step
    run_check(256, k2)   # divisible batch: 2 parallel grid steps of 128 rows
    run_check(300, k3)   # indivisible batch: padded to 2 x 152, sliced back

    print("KERNEL_OK")
</pallas_src>

<mosaic_0001>
module attributes {stable_mosaic.version = 11 : i64} {
  func.func @receiver_kernel(%arg0: i32, %arg1: memref<8x32xf32, #tpu.memory_space<vmem>>, %arg2: memref<32x128xbf16, #tpu.memory_space<vmem>>, %arg3: memref<1x128xf32, #tpu.memory_space<vmem>>, %arg4: memref<128x64xbf16, #tpu.memory_space<vmem>>, %arg5: memref<1x64xf32, #tpu.memory_space<vmem>>, %arg6: memref<2x8x32xf32, #tpu.memory_space<vmem>>) attributes {dimension_semantics = [#tpu.dimension_semantics<parallel>], iteration_bounds = array<i64: 1>, scalar_prefetch = 0 : i64, scratch_operands = 0 : i64, tpu.core_type = #tpu.core_type<tc>, window_params = [{transform_indices = @transform_0, window_bounds = array<i64: 8, 32>}, {pipeline_mode = #tpu.pipeline_mode<synchronous>, transform_indices = @transform_1, window_bounds = array<i64: 32, 128>}, {pipeline_mode = #tpu.pipeline_mode<synchronous>, transform_indices = @transform_2, window_bounds = array<i64: 1, 128>}, {pipeline_mode = #tpu.pipeline_mode<synchronous>, transform_indices = @transform_3, window_bounds = array<i64: 128, 64>}, {pipeline_mode = #tpu.pipeline_mode<synchronous>, transform_indices = @transform_4, window_bounds = array<i64: 1, 64>}, {transform_indices = @transform_5, window_bounds = array<i64: 2, 8, 32>}]} {
    %c0 = arith.constant 0 : index
    %c0_0 = arith.constant 0 : index
    %0 = vector.load %arg1[%c0, %c0_0] : memref<8x32xf32, #tpu.memory_space<vmem>>, vector<8x32xf32>
    %1 = arith.truncf %0 : vector<8x32xf32> to vector<8x32xbf16>
    %c0_1 = arith.constant 0 : index
    %c0_2 = arith.constant 0 : index
    %2 = vector.load %arg2[%c0_1, %c0_2] : memref<32x128xbf16, #tpu.memory_space<vmem>>, vector<32x128xbf16>
    %cst = arith.constant dense<0.000000e+00> : vector<8x128xf32>
    %3 = tpu.matmul %1, %2, %cst {dimension_numbers = #tpu.dot_dimension_numbers<[1], [0], [0], [1], [0, 0, 1, 1], [], []>} : vector<8x32xbf16>, vector<32x128xbf16>, vector<8x128xf32> -> vector<8x128xf32>
    %c0_3 = arith.constant 0 : index
    %c0_4 = arith.constant 0 : index
    %4 = vector.load %arg3[%c0_3, %c0_4] : memref<1x128xf32, #tpu.memory_space<vmem>>, vector<1x128xf32>
    %5 = vector.broadcast %4 : vector<1x128xf32> to vector<8x128xf32>
    %6 = arith.addf %3, %5 : vector<8x128xf32>
    %cst_5 = arith.constant 0.000000e+00 : f32
    %7 = vector.broadcast %cst_5 : f32 to vector<8x128xf32>
    %8 = arith.cmpf ogt, %6, %7 : vector<8x128xf32>
    %cst_6 = arith.constant 0.00999999977 : f32
    %9 = vector.broadcast %cst_6 : f32 to vector<8x128xf32>
    %10 = arith.mulf %9, %6 : vector<8x128xf32>
    %11 = arith.select %8, %6, %10 : vector<8x128xi1>, vector<8x128xf32>
    %12 = arith.truncf %11 : vector<8x128xf32> to vector<8x128xbf16>
    %c0_7 = arith.constant 0 : index
    %c0_8 = arith.constant 0 : index
    %13 = vector.load %arg4[%c0_7, %c0_8] : memref<128x64xbf16, #tpu.memory_space<vmem>>, vector<128x64xbf16>
    %cst_9 = arith.constant dense<0.000000e+00> : vector<8x64xf32>
    %14 = tpu.matmul %12, %13, %cst_9 {dimension_numbers = #tpu.dot_dimension_numbers<[1], [0], [0], [1], [0, 0, 1, 1], [], []>} : vector<8x128xbf16>, vector<128x64xbf16>, vector<8x64xf32> -> vector<8x64xf32>
    %c0_10 = arith.constant 0 : index
    %c0_11 = arith.constant 0 : index
    %15 = vector.load %arg5[%c0_10, %c0_11] : memref<1x64xf32, #tpu.memory_space<vmem>>, vector<1x64xf32>
    %16 = vector.broadcast %15 : vector<1x64xf32> to vector<8x64xf32>
    %17 = arith.addf %14, %16 : vector<8x64xf32>
    %18 = vector.extract_strided_slice %17 {offsets = [0, 0], sizes = [8, 32], strides = [1, 1]} : vector<8x64xf32> to vector<8x32xf32>
    %c0_12 = arith.constant 0 : index
    %c0_13 = arith.constant 0 : index
    %c0_14 = arith.constant 0 : index
    %19 = vector.load %arg6[%c0_12, %c0_13, %c0_14] : memref<2x8x32xf32, #tpu.memory_space<vmem>>, vector<1x8x32xf32>
    %20 = vector.shape_cast %19 : vector<1x8x32xf32> to vector<8x32xf32>
    %21 = vector.shape_cast %18 : vector<8x32xf32> to vector<1x8x32xf32>
    tpu.vector_store %arg6[%c0_12, %c0_13, %c0_14], %21 {strides = array<i32>} : memref<2x8x32xf32, #tpu.memory_space<vmem>>, vector<1x8x32xf32>,
    %22 = vector.extract_strided_slice %17 {offsets = [0, 32], sizes = [8, 32], strides = [1, 1]} : vector<8x64xf32> to vector<8x32xf32>
    %c1 = arith.constant 1 : index
    %c0_15 = arith.constant 0 : index
    %c0_16 = arith.constant 0 : index
    %23 = vector.load %arg6[%c1, %c0_15, %c0_16] : memref<2x8x32xf32, #tpu.memory_space<vmem>>, vector<1x8x32xf32>
    %24 = vector.shape_cast %23 : vector<1x8x32xf32> to vector<8x32xf32>
    %25 = vector.shape_cast %22 : vector<8x32xf32> to vector<1x8x32xf32>
    tpu.vector_store %arg6[%c1, %c0_15, %c0_16], %25 {strides = array<i32>} : memref<2x8x32xf32, #tpu.memory_space<vmem>>, vector<1x8x32xf32>,
    return
  }
  func.func @transform_0(%arg0: i32) -> (i32, i32) {
    %c0_i32 = arith.constant 0 : i32
    %c0_i32_0 = arith.constant 0 : i32
    return %arg0, %c0_i32 : i32, i32
  }
  func.func @transform_1(%arg0: i32) -> (i32, i32) {
    %c0_i32 = arith.constant 0 : i32
    %c0_i32_0 = arith.constant 0 : i32
    %c0_i32_1 = arith.constant 0 : i32
    return %c0_i32, %c0_i32_0 : i32, i32
  }
  func.func @transform_2(%arg0: i32) -> (i32, i32) {
    %c0_i32 = arith.constant 0 : i32
    %c0_i32_0 = arith.constant 0 : i32
    %c0_i32_1 = arith.constant 0 : i32
    return %c0_i32, %c0_i32_0 : i32, i32
  }
  func.func @transform_3(%arg0: i32) -> (i32, i32) {
    %c0_i32 = arith.constant 0 : i32
    %c0_i32_0 = arith.constant 0 : i32
    %c0_i32_1 = arith.constant 0 : i32
    return %c0_i32, %c0_i32_0 : i32, i32
  }
  func.func @transform_4(%arg0: i32) -> (i32, i32) {
    %c0_i32 = arith.constant 0 : i32
    %c0_i32_0 = arith.constant 0 : i32
    %c0_i32_1 = arith.constant 0 : i32
    return %c0_i32, %c0_i32_0 : i32, i32
  }
  func.func @transform_5(%arg0: i32) -> (i32, i32, i32) {
    %c0_i32 = arith.constant 0 : i32
    %c0_i32_0 = arith.constant 0 : i32
    %c0_i32_1 = arith.constant 0 : i32
    return %c0_i32, %arg0, %c0_i32_0 : i32, i32, i32
  }
}

</mosaic_0001>

<llo_original>
// kernel: receiver_forward.1
$region0: #{receiver_forward.1}
  #allocation0 [shape = 'u32[]', space=smem, size = 0x4, offset = 0x4, fixed_abs, tag = 'smem constant byte address 0x4 - core index']
  #allocation1 [shape = 'u32[72,128]{1,0:T(1,128)}', space=vmem, size = 0x9000, scoped, tag = 'internal scratch']
  %s0 = inlined_call_operand.vmem [shape: f32[8,32], index: 0, kind: input, shape index: {}]
  %s1 = inlined_call_operand.vmem [shape: bf16[32,128], index: 1, kind: input, shape index: {}]
  %s2 = inlined_call_operand.vmem [shape: f32[1,128], index: 2, kind: input, shape index: {}]
  %s3 = inlined_call_operand.vmem [shape: bf16[128,64], index: 3, kind: input, shape index: {}]
  %s4 = inlined_call_operand.vmem [shape: f32[1,64], index: 4, kind: input, shape index: {}]
  %s5 = inlined_call_operand.hbm [shape: f32[2,8,32], index: 5, kind: output, shape index: {}]
  %s6 = sld [smem:[#allocation0]]
  $region30: #{receiver_forward.1} parent=0
    _
  %s8 = ssub.s32 1, %s6
  %s9 = scalar_select 0, %s8, %s6
  $region1: #{receiver_forward.1} parent=0
    #allocation2 [shape = 'u8[8192]{0}', space=vmem, size = 0x2000, scoped, tag = 'output window, operand 0, single buffered']
    #allocation3 [shape = 's32[1]{0}', space=sflag, size = 0x4, scoped, tag = 'scoped memory for receiver_forward.1']
    %10 = vsyncpa [#allocation3], 0
    // Predicated region
    $region2: #{receiver_forward.1} parent=1 // pred_check
      _
    $region3: #{receiver_forward.1} parent=1 // pred_check_branch
      %12 = sbr.rel (0) target = $region5
    $region4: #{receiver_forward.1} parent=1 // pred_region
      _
    $region5: #{receiver_forward.1} parent=1 // pred_fallthru
      _
    // Predicated region
    $region6: #{receiver_forward.1} parent=1 // pred_check
      _
    $region7: #{receiver_forward.1} parent=1 // pred_check_branch
      %14 = sbr.rel (0) target = $region9
    $region8: #{receiver_forward.1} parent=1 // pred_region
      _
    $region9: #{receiver_forward.1} parent=1 // pred_fallthru
      _
    // Predicated region
    $region10: #{receiver_forward.1} parent=1 // pred_check
      _
    $region11: #{receiver_forward.1} parent=1 // pred_check_branch
      %16 = sbr.rel (0) target = $region13
    $region12: #{receiver_forward.1} parent=1 // pred_region
      _
    $region13: #{receiver_forward.1} parent=1 // pred_fallthru
      _
    // Predicated region
    $region14: #{receiver_forward.1} parent=1 // pred_check
      _
    $region15: #{receiver_forward.1} parent=1 // pred_check_branch
      %18 = sbr.rel (0) target = $region17
    $region16: #{receiver_forward.1} parent=1 // pred_region
      _
    $region17: #{receiver_forward.1} parent=1 // pred_fallthru
      _
    // Predicated region
    $region18: #{receiver_forward.1} parent=1 // pred_check
      _
    $region19: #{receiver_forward.1} parent=1 // pred_check_branch
      %20 = sbr.rel (0) target = $region21
    $region20: #{receiver_forward.1} parent=1 // pred_region
      _
    $region21: #{receiver_forward.1} parent=1 // pred_fallthru
      _
    %v22 = vld [vmem:[%s0] sm:$0xff]
    %v23 = vpack.c.bf16 %v22, %v22
    %v24 = vld [vmem:[%s1] sm:$0xf]
    %v25 = vld [vmem:[%s1 + $0x4] sm:$0xf]
    %v26 = vld [vmem:[%s1 + $0x8] sm:$0xf]
    %v27 = vld [vmem:[%s1 + $0xc] sm:$0xf]
    %v28 = vld [vmem:[%s2] sm:$0x1]
    %v30 = vperm.slane %v28, 0
    %v36 = vunpack.c.l.b16 %v24
    %v37 = vunpack.c.l.b16 %v25
    %v38 = vunpack.c.l.b16 %v26
    %v39 = vunpack.c.l.b16 %v27
    %v40 = vpack.c.b16 %v37, %v36
    %v41 = vpack.c.b16 %v39, %v38
    %vm44 = vcmask 261120
    %v46 = vsel %vm44, %v23, 0
    %48 = vmatpush.bf16.msra.mxu0 0
    %49 = vmatpush.bf16.msra.mxu0 0
    %50 = vmatpush.bf16.msra.mxu0 0
    %51 = vmatpush.bf16.msra.mxu0 0
    %52 = vmatpush.bf16.msra.mxu0 0
    %53 = vmatpush.bf16.msra.mxu0 0
    %54 = vmatpush.bf16.msra.mxu0 %v41
    %55 = vmatpush.bf16.msra.mxu0 %v40
    %56 = vmatmul.bf16.gmra.mxu0 %v46
    %v57 = vpop.f32.mrf.mxu0
    %v58 = vadd.f32 %v30, %v57
    %v59 = vpop.f32.mrf.mxu0
    %60 = vdwg.mxu0
    %vm61 = vcmp.gt.f32.partialorder %v58, 0.0
    %v62 = vmul.f32 %v58, 0.01
    %v63 = vsel %vm61, %v58, %v62
    %v64 = vpack.c.bf16 %v63, %v63
    %v65 = vld [vmem:[%s3] sm:$0xf]
    %v66 = vld [vmem:[%s3 + $0x4] sm:$0xf]
    %v67 = vld [vmem:[%s3 + $0x8] sm:$0xf]
    %v68 = vld [vmem:[%s3 + $0xc] sm:$0xf]
    %v69 = vld [vmem:[%s3 + $0x10] sm:$0xf]
    %v70 = vld [vmem:[%s3 + $0x14] sm:$0xf]
    %v71 = vld [vmem:[%s3 + $0x18] sm:$0xf]
    %v72 = vld [vmem:[%s3 + $0x1c] sm:$0xf]
    %v73 = vld [vmem:[%s3 + $0x20] sm:$0xf]
    %v74 = vld [vmem:[%s3 + $0x24] sm:$0xf]
    %v75 = vld [vmem:[%s3 + $0x28] sm:$0xf]
    %v76 = vld [vmem:[%s3 + $0x2c] sm:$0xf]
    %v77 = vld [vmem:[%s3 + $0x30] sm:$0xf]
    %v78 = vld [vmem:[%s3 + $0x34] sm:$0xf]
    %v79 = vld [vmem:[%s3 + $0x38] sm:$0xf]
    %v80 = vld [vmem:[%s3 + $0x3c] sm:$0xf]
    %v81 = vld [vmem:[%s4] sm:$0x1]
    %v83 = vperm.slane %v81, 0
    %v101 = vunpack.c.l.b16 %v65
    %v102 = vunpack.c.l.b16 %v66
    %v103 = vunpack.c.l.b16 %v67
    %v104 = vunpack.c.l.b16 %v68
    %v105 = vunpack.c.l.b16 %v69
    %v106 = vunpack.c.l.b16 %v70
    %v107 = vunpack.c.l.b16 %v71
    %v108 = vunpack.c.l.b16 %v72
    %v109 = vunpack.c.l.b16 %v73
    %v110 = vunpack.c.l.b16 %v74
    %v111 = vunpack.c.l.b16 %v75
    %v112 = vunpack.c.l.b16 %v76
    %v113 = vunpack.c.l.b16 %v77
    %v114 = vunpack.c.l.b16 %v78
    %v115 = vunpack.c.l.b16 %v79
    %v116 = vunpack.c.l.b16 %v80
    %v117 = vpack.c.b16 %v102, %v101
    %v118 = vpack.c.b16 %v104, %v103
    %v119 = vpack.c.b16 %v106, %v105
    %v120 = vpack.c.b16 %v108, %v107
    %v121 = vpack.c.b16 %v110, %v109
    %v122 = vpack.c.b16 %v112, %v111
    %v123 = vpack.c.b16 %v114, %v113
    %v124 = vpack.c.b16 %v116, %v115
    %133 = vmatpush.bf16.msra.mxu0 %v124
    %134 = vmatpush.bf16.msra.mxu0 %v123
    %135 = vmatpush.bf16.msra.mxu0 %v122
    %136 = vmatpush.bf16.msra.mxu0 %v121
    %137 = vmatpush.bf16.msra.mxu0 %v120
    %138 = vmatpush.bf16.msra.mxu0 %v119
    %139 = vmatpush.bf16.msra.mxu0 %v118
    %140 = vmatpush.bf16.msra.mxu0 %v117
    %141 = vmatmul.bf16.gmra.mxu0 %v64
    %v142 = vpop.f32.mrf.mxu0
    %v143 = vadd.f32 %v83, %v142
    %v144 = vpop.f32.mrf.mxu0
    %145 = vdwg.mxu0
    %146 = vst.msk [vmem:[#allocation2] sm:$0xff] %vm44, %v143
    %148 = vrot.lane.b32.xlu0 %v143, 96
    %v149 = vpop.permute.xlu0 %148
    %s151 = scalar_lea.vmem [#allocation2], 8
    %152 = vst.msk [vmem:[%s151] sm:$0xff] %vm44, %v149
    // Predicated region
    $region22: #{receiver_forward.1} parent=1 // pred_check
      _
    $region23: #{receiver_forward.1} parent=1 // pred_check_branch
      %154 = sbr.rel (0) target = $region25
    $region24: #{receiver_forward.1} parent=1 // pred_region
      %156 = vsyncadd [#allocation3], 0
      %s157 = sshll.u32 [#allocation2], 4
      %s158 = int_to_ptr.vmem [resolvable:$true] %s157
      %s159 = sshll.u32 %s5, 4
      %s160 = int_to_ptr.hbm [resolvable:$true] %s159
      %165 = dma.vmem_to_hbm [thread:$0]  %s158, 256, %s160, [#allocation3], 128, 128, 8
    $region25: #{receiver_forward.1} parent=1 // pred_fallthru
      _
    // Predicated region
    $region26: #{receiver_forward.1} parent=1 // pred_check
      _
    $region27: #{receiver_forward.1} parent=1 // pred_check_branch
      %167 = sbr.rel (0) target = $region29
    $region28: #{receiver_forward.1} parent=1 // pred_region
      %169 = dma.done [#allocation3], 256
    $region29: #{receiver_forward.1} parent=1 // pred_fallthru
      _
    %170 = vsyncpa [#allocation3], 1

</llo_original>
